<compile_context>
chip_gen: v7x
topology: tpu7x:2x2x1
jax: 0.10.0
libtpu: 0.0.40
codegen_flags: <defaults>
</compile_context>

<pallas_src>
import jax
import jax.numpy as jnp
from jax.experimental import pallas as pl
from jax.experimental.pallas import tpu as pltpu

# Hyperparameters consistent with the module's __init__ / forward.
INPUT_DIM = 16
HIDDEN = 32
N_LAYERS = 2
N_HEADS = 4
N_CLASSES = 4
BATCH = 8
LN_EPS = 1e-5            # torch.nn.LayerNorm default

# ---- packed-parameter layout --------------------------------------------------
WCOLS = 128              # every packed row is lane-dense (128 lanes)
PADH = 128               # contracting dims zero-padded to a full tile
assert 4 * HIDDEN == WCOLS

# weight slab row offsets (all multiples of 8 -> sublane-tile aligned)
R_WIN = 0                                  # input_proj weight (INPUT_DIM, 128)
R_ATTN = R_WIN + INPUT_DIM                 # fused attn weights (128, 128) / layer
R_F1 = R_ATTN + N_LAYERS * PADH            # ffn linear1        (128, 128) / layer
R_F2 = R_F1 + N_LAYERS * PADH              # ffn linear2        (128, 128) / layer
R_FC = R_F2 + N_LAYERS * PADH              # fc head            (128, 128)
W_ROWS = R_FC + PADH                       # 912 rows

# bias/LN slab row offsets (one zero-padded vector per row)
B_BIN = 0
B_LAYER = 1                                # 7 rows per layer start here
B_ATTN, B_LN1W, B_LN1B, B_F1B, B_F2B, B_LN2W, B_LN2B = range(7)
B_FCB = B_LAYER + 7 * N_LAYERS             # 15
B_ROWS = B_FCB + 1                         # 16


def _layernorm(y, g, b):
    """LayerNorm over the first HIDDEN lanes.  `y` may carry zero pad lanes:
    sums stay exact because pad lanes are zero, and gamma/beta pad lanes (zero)
    re-zero the pad lanes of the output.  var = E[y^2] - mu^2 (biased, like
    torch) avoids the extra broadcasted temp."""
    mu = jnp.sum(y, axis=-1, keepdims=True) * (1.0 / HIDDEN)
    ms = jnp.sum(y * y, axis=-1, keepdims=True) * (1.0 / HIDDEN)
    var = ms - mu * mu
    return (y - mu) * jax.lax.rsqrt(var + LN_EPS) * g + b


# ---- kernel --------------------------------------------------------------------
def emotion_transformer_kernel(x_ref, w_ref, b_ref, o_ref):
    wdt = w_ref.dtype                        # matmul operand dtype (f32 or bf16)

    def bias(row):
        return b_ref[row:row + 1, :]         # (1, 128); zero beyond real width

    def mm(a, rstart, rlen):
        return jnp.dot(a.astype(wdt), w_ref[rstart:rstart + rlen, :],
                       preferred_element_type=jnp.float32)

    # input_proj: Linear(input_dim, hidden); output lanes >= HIDDEN are zero.
    h = mm(x_ref[...], R_WIN, INPUT_DIM) + bias(B_BIN)

    # TransformerEncoder: post-norm layers, ReLU FFN, dropout == identity.
    for l in range(N_LAYERS):
        base = B_LAYER + 7 * l

        # Self-attention with seq_len == 1: softmax over the single key == 1,
        # so attention == out_proj(V(x)), fused host-side into one matmul.
        attn = mm(h, R_ATTN + l * PADH, PADH) + bias(base + B_ATTN)
        h = _layernorm(h + attn, bias(base + B_LN1W), bias(base + B_LN1B))

        # Feed-forward: Linear(H, 4H) -> ReLU -> Linear(4H, H).
        ff = mm(h, R_F1 + l * PADH, PADH) + bias(base + B_F1B)
        ff = jnp.maximum(ff, 0.0)
        ff = mm(ff, R_F2 + l * PADH, PADH) + bias(base + B_F2B)
        h = _layernorm(h + ff, bias(base + B_LN2W), bias(base + B_LN2B))

    # fc head (dropout before fc is identity in eval); columns >= N_CLASSES are
    # zero-padded -> one lane-dense, unmasked store.
    o_ref[...] = (mm(h, R_FC, PADH) + bias(B_FCB)).astype(o_ref.dtype)


# ---- host-side packing (one-time) ----------------------------------------------
def pack_params(params, weight_dtype=jnp.float32):
    """Fuse the seq_len==1 attention and pack all parameters into 2 slabs."""
    (win, bin_, qkvw, qkvb, ow, ob, ln1w, ln1b,
     f1w, f1b, f2w, f2b, ln2w, ln2b, fcw, fcb) = params
    H = HIDDEN
    # The V + out_proj fusion is exact only for seq_len == 1 (softmax over a
    # single key == 1) and eval-mode dropout; the module's forward always
    # unsqueezes to seq_len == 1, but guard the shapes anyway.
    assert qkvw.shape == (N_LAYERS, H, 3 * H) and ow.shape == (N_LAYERS, H, H)
    assert win.shape == (INPUT_DIM, H) and fcw.shape == (H, N_CLASSES)

    vw = qkvw[:, :, 2 * H:]                                   # (L, H, H)
    vb = qkvb[:, 2 * H:]                                      # (L, H)
    w_attn = jnp.einsum('lij,ljk->lik', vw, ow)               # (L, H, H)
    b_attn = jnp.einsum('lj,ljk->lk', vb, ow) + ob            # (L, H)

    def pad_w(m, rows):      # zero-pad a weight block to (rows, 128)
        return jnp.pad(m, ((0, rows - m.shape[0]), (0, WCOLS - m.shape[1])))

    def pad_b(v):            # one vector -> one lane-dense, zero-padded row
        v = v.reshape(1, -1)
        return jnp.pad(v, ((0, 0), (0, WCOLS - v.shape[1])))

    w_rows = [pad_w(win, INPUT_DIM)]
    w_rows += [pad_w(w_attn[l], PADH) for l in range(N_LAYERS)]
    w_rows += [pad_w(f1w[l], PADH) for l in range(N_LAYERS)]
    w_rows += [pad_w(f2w[l], PADH) for l in range(N_LAYERS)]
    w_rows += [pad_w(fcw, PADH)]
    w_pack = jnp.concatenate(w_rows, axis=0)                  # (912, 128)

    b_rows = [pad_b(bin_)]
    for l in range(N_LAYERS):
        b_rows += [pad_b(b_attn[l]), pad_b(ln1w[l]), pad_b(ln1b[l]),
                   pad_b(f1b[l]), pad_b(f2b[l]), pad_b(ln2w[l]), pad_b(ln2b[l])]
    b_rows += [pad_b(fcb)]
    b_pack = jnp.concatenate(b_rows, axis=0)                  # (16, 128)

    assert w_pack.shape == (W_ROWS, WCOLS) and b_pack.shape == (B_ROWS, WCOLS)
    # Matmul operands may be bf16 (single MXU pass, half the weight-slab DMA);
    # bias/LN rows stay f32 since all elementwise math is f32.
    return w_pack.astype(weight_dtype), b_pack


# ---- chip-aware tiling ----------------------------------------------------------
def _tensorcores_per_chip():
    """2 for v7x (two TensorCores per chip), else 1 (v5e/v6e)."""
    try:
        kind = jax.devices()[0].device_kind.lower()
    except Exception:
        return 1
    return 2 if "7" in kind else 1


def _pick_bt(batch, n_cores):
    """Largest batch tile (multiple of 8, <= 4096) dividing the batch while
    leaving at least `n_cores` grid steps.  Per-step VMEM (~1.2 KB/row
    double-buffered + ~0.5 MB resident slabs) is nowhere near the scoped-VMEM
    default on any generation, so the tile is chosen purely to amortize the
    ~0.35 us per-step overhead and to feed v7x's second TensorCore."""
    cap = min(batch, 4096)
    for bt in range(cap, 0, -8):
        if batch % bt == 0 and batch // bt >= n_cores:
            return bt
    return min(batch, 8)


def emotion_transformer(x, w_pack, b_pack):
    B = x.shape[0]
    assert B % 8 == 0, "batch must be a multiple of 8 (sublane tile)"
    bt = _pick_bt(B, _tensorcores_per_chip())

    out = pl.pallas_call(
        emotion_transformer_kernel,
        out_shape=jax.ShapeDtypeStruct((B, WCOLS), jnp.float32),
        grid_spec=pltpu.PrefetchScalarGridSpec(
            num_scalar_prefetch=0,
            grid=(B // bt,),
            in_specs=[
                pl.BlockSpec((bt, INPUT_DIM), lambda i: (i, 0)),
                # Constant index_map -> slabs are fetched once for the grid.
                pl.BlockSpec((W_ROWS, WCOLS), lambda i: (0, 0)),
                pl.BlockSpec((B_ROWS, WCOLS), lambda i: (0, 0)),
            ],
            out_specs=pl.BlockSpec((bt, WCOLS), lambda i: (i, 0)),
        ),
        compiler_params=pltpu.CompilerParams(
            dimension_semantics=("parallel",)),
    )(x, w_pack, b_pack)
    return out[:, :N_CLASSES]


# ---- original (unfused) parameters + pure-JAX reference -------------------------
def init_params(key):
    ks = jax.random.split(key, 16)
    s = 0.1

    def nrm(k, shape):
        return s * jax.random.normal(k, shape, jnp.float32)

    win = nrm(ks[0], (INPUT_DIM, HIDDEN))
    bin_ = nrm(ks[1], (1, HIDDEN))
    qkvw = nrm(ks[2], (N_LAYERS, HIDDEN, 3 * HIDDEN))   # in_proj_weight^T, stacked
    qkvb = nrm(ks[3], (N_LAYERS, 3 * HIDDEN))
    ow = nrm(ks[4], (N_LAYERS, HIDDEN, HIDDEN))         # out_proj.weight^T
    ob = nrm(ks[5], (N_LAYERS, HIDDEN))
    ln1w = 1.0 + nrm(ks[6], (N_LAYERS, HIDDEN))
    ln1b = nrm(ks[7], (N_LAYERS, HIDDEN))
    f1w = nrm(ks[8], (N_LAYERS, HIDDEN, 4 * HIDDEN))
    f1b = nrm(ks[9], (N_LAYERS, 4 * HIDDEN))
    f2w = nrm(ks[10], (N_LAYERS, 4 * HIDDEN, HIDDEN))
    f2b = nrm(ks[11], (N_LAYERS, HIDDEN))
    ln2w = 1.0 + nrm(ks[12], (N_LAYERS, HIDDEN))
    ln2b = nrm(ks[13], (N_LAYERS, HIDDEN))
    fcw = nrm(ks[14], (HIDDEN, N_CLASSES))
    fcb = nrm(ks[15], (1, N_CLASSES))
    return [win, bin_, qkvw, qkvb, ow, ob, ln1w, ln1b,
            f1w, f1b, f2w, f2b, ln2w, ln2b, fcw, fcb]


def reference(x, params):
    """Pure-JAX reference with the FULL multi-head attention (seq_len=1)."""
    (win, bin_, qkvw, qkvb, ow, ob, ln1w, ln1b,
     f1w, f1b, f2w, f2b, ln2w, ln2b, fcw, fcb) = params
    H, dh = HIDDEN, HIDDEN // N_HEADS
    h = x @ win + bin_
    for l in range(N_LAYERS):
        qkv = h @ qkvw[l] + qkvb[l]
        q, k, v = jnp.split(qkv, 3, axis=-1)
        qh = q.reshape(-1, N_HEADS, dh)
        kh = k.reshape(-1, N_HEADS, dh)
        vh = v.reshape(-1, N_HEADS, dh)
        scores = jnp.sum(qh * kh, axis=-1, keepdims=True) / jnp.sqrt(float(dh))
        w = jax.nn.softmax(scores, axis=-1)          # single key -> all ones
        attn = (w * vh).reshape(-1, H) @ ow[l] + ob[l]
        h = _layernorm(h + attn, ln1w[l], ln1b[l])
        ff = jnp.maximum(h @ f1w[l] + f1b[l], 0.0) @ f2w[l] + f2b[l]
        h = _layernorm(h + ff, ln2w[l], ln2b[l])
    return h @ fcw + fcb


if __name__ == "__main__":
    key = jax.random.PRNGKey(0)
    kx, kp = jax.random.split(key)
    x = jax.random.normal(kx, (BATCH, INPUT_DIM), jnp.float32)
    params = init_params(kp)
    ref = reference(x, params)

    # f32 matmul operands.  Tolerance allows for the XLA reference's default
    # (reduced-precision) TPU matmul passes vs the kernel's MXU path.
    w32, b32 = pack_params(params, weight_dtype=jnp.float32)
    out32 = jax.block_until_ready(emotion_transformer(x, w32, b32))
    assert out32.shape == (BATCH, N_CLASSES)
    assert jnp.allclose(out32, ref, atol=2e-2, rtol=2e-2), "f32 mismatch vs reference"

    # bf16 matmul operands (per perf review): single-pass MXU, half the
    # weight DMA; looser tolerance vs the f32 reference.
    w16, b16 = pack_params(params, weight_dtype=jnp.bfloat16)
    out16 = jax.block_until_ready(emotion_transformer(x, w16, b16))
    assert out16.shape == (BATCH, N_CLASSES)
    assert jnp.allclose(out16, ref, atol=6e-2, rtol=6e-2), "bf16 mismatch vs reference"

    print("KERNEL_OK")
</pallas_src>

<mosaic_0001>
module attributes {stable_mosaic.version = 11 : i64} {
  func.func @emotion_transformer_kernel(%arg0: i32, %arg1: memref<8x16xf32, #tpu.memory_space<vmem>>, %arg2: memref<912x128xf32, #tpu.memory_space<vmem>>, %arg3: memref<16x128xf32, #tpu.memory_space<vmem>>, %arg4: memref<8x128xf32, #tpu.memory_space<vmem>>) attributes {dimension_semantics = [#tpu.dimension_semantics<parallel>], iteration_bounds = array<i64: 1>, scalar_prefetch = 0 : i64, scratch_operands = 0 : i64, tpu.core_type = #tpu.core_type<tc>, window_params = [{transform_indices = @transform_0, window_bounds = array<i64: 8, 16>}, {pipeline_mode = #tpu.pipeline_mode<synchronous>, transform_indices = @transform_1, window_bounds = array<i64: 912, 128>}, {pipeline_mode = #tpu.pipeline_mode<synchronous>, transform_indices = @transform_2, window_bounds = array<i64: 16, 128>}, {transform_indices = @transform_3, window_bounds = array<i64: 8, 128>}]} {
    %c0 = arith.constant 0 : index
    %c0_0 = arith.constant 0 : index
    %0 = vector.load %arg1[%c0, %c0_0] : memref<8x16xf32, #tpu.memory_space<vmem>>, vector<8x16xf32>
    %c0_1 = arith.constant 0 : index
    %c0_2 = arith.constant 0 : index
    %1 = vector.load %arg2[%c0_1, %c0_2] : memref<912x128xf32, #tpu.memory_space<vmem>>, vector<16x128xf32>
    %cst = arith.constant dense<0.000000e+00> : vector<8x128xf32>
    %2 = tpu.matmul %0, %1, %cst {dimension_numbers = #tpu.dot_dimension_numbers<[1], [0], [0], [1], [0, 0, 1, 1], [], []>} : vector<8x16xf32>, vector<16x128xf32>, vector<8x128xf32> -> vector<8x128xf32>
    %c0_3 = arith.constant 0 : index
    %c0_4 = arith.constant 0 : index
    %3 = vector.load %arg3[%c0_3, %c0_4] : memref<16x128xf32, #tpu.memory_space<vmem>>, vector<1x128xf32>
    %4 = vector.broadcast %3 : vector<1x128xf32> to vector<8x128xf32>
    %5 = arith.addf %2, %4 : vector<8x128xf32>
    %c16 = arith.constant 16 : index
    %c0_5 = arith.constant 0 : index
    %6 = vector.load %arg2[%c16, %c0_5] : memref<912x128xf32, #tpu.memory_space<vmem>>, vector<128x128xf32>
    %cst_6 = arith.constant dense<0.000000e+00> : vector<8x128xf32>
    %7 = tpu.matmul %5, %6, %cst_6 {dimension_numbers = #tpu.dot_dimension_numbers<[1], [0], [0], [1], [0, 0, 1, 1], [], []>} : vector<8x128xf32>, vector<128x128xf32>, vector<8x128xf32> -> vector<8x128xf32>
    %c1 = arith.constant 1 : index
    %c0_7 = arith.constant 0 : index
    %8 = vector.load %arg3[%c1, %c0_7] : memref<16x128xf32, #tpu.memory_space<vmem>>, vector<1x128xf32>
    %9 = vector.broadcast %8 : vector<1x128xf32> to vector<8x128xf32>
    %10 = arith.addf %7, %9 : vector<8x128xf32>
    %11 = arith.addf %5, %10 : vector<8x128xf32>
    %c2 = arith.constant 2 : index
    %c0_8 = arith.constant 0 : index
    %12 = vector.load %arg3[%c2, %c0_8] : memref<16x128xf32, #tpu.memory_space<vmem>>, vector<1x128xf32>
    %c3 = arith.constant 3 : index
    %c0_9 = arith.constant 0 : index
    %13 = vector.load %arg3[%c3, %c0_9] : memref<16x128xf32, #tpu.memory_space<vmem>>, vector<1x128xf32>
    %cst_10 = arith.constant dense<0.000000e+00> : vector<8xf32>
    %14 = vector.multi_reduction <add>, %11, %cst_10 [1] : vector<8x128xf32> to vector<8xf32>
    %15 = vector.shape_cast %14 : vector<8xf32> to vector<8x1xf32>
    %cst_11 = arith.constant 3.125000e-02 : f32
    %16 = vector.broadcast %cst_11 : f32 to vector<8x1xf32>
    %17 = arith.mulf %15, %16 : vector<8x1xf32>
    %18 = arith.mulf %11, %11 : vector<8x128xf32>
    %cst_12 = arith.constant dense<0.000000e+00> : vector<8xf32>
    %19 = vector.multi_reduction <add>, %18, %cst_12 [1] : vector<8x128xf32> to vector<8xf32>
    %20 = vector.shape_cast %19 : vector<8xf32> to vector<8x1xf32>
    %cst_13 = arith.constant 3.125000e-02 : f32
    %21 = vector.broadcast %cst_13 : f32 to vector<8x1xf32>
    %22 = arith.mulf %20, %21 : vector<8x1xf32>
    %23 = arith.mulf %17, %17 : vector<8x1xf32>
    %24 = arith.subf %22, %23 : vector<8x1xf32>
    %25 = vector.broadcast %17 : vector<8x1xf32> to vector<8x128xf32>
    %26 = arith.subf %11, %25 : vector<8x128xf32>
    %cst_14 = arith.constant 9.99999974E-6 : f32
    %27 = vector.broadcast %cst_14 : f32 to vector<8x1xf32>
    %28 = arith.addf %24, %27 : vector<8x1xf32>
    %29 = math.rsqrt %28 : vector<8x1xf32>
    %30 = vector.broadcast %29 : vector<8x1xf32> to vector<8x128xf32>
    %31 = arith.mulf %26, %30 : vector<8x128xf32>
    %32 = vector.broadcast %12 : vector<1x128xf32> to vector<8x128xf32>
    %33 = arith.mulf %31, %32 : vector<8x128xf32>
    %34 = vector.broadcast %13 : vector<1x128xf32> to vector<8x128xf32>
    %35 = arith.addf %33, %34 : vector<8x128xf32>
    %c272 = arith.constant 272 : index
    %c0_15 = arith.constant 0 : index
    %36 = vector.load %arg2[%c272, %c0_15] : memref<912x128xf32, #tpu.memory_space<vmem>>, vector<128x128xf32>
    %cst_16 = arith.constant dense<0.000000e+00> : vector<8x128xf32>
    %37 = tpu.matmul %35, %36, %cst_16 {dimension_numbers = #tpu.dot_dimension_numbers<[1], [0], [0], [1], [0, 0, 1, 1], [], []>} : vector<8x128xf32>, vector<128x128xf32>, vector<8x128xf32> -> vector<8x128xf32>
    %c4 = arith.constant 4 : index
    %c0_17 = arith.constant 0 : index
    %38 = vector.load %arg3[%c4, %c0_17] : memref<16x128xf32, #tpu.memory_space<vmem>>, vector<1x128xf32>
    %39 = vector.broadcast %38 : vector<1x128xf32> to vector<8x128xf32>
    %40 = arith.addf %37, %39 : vector<8x128xf32>
    %cst_18 = arith.constant 0.000000e+00 : f32
    %41 = vector.broadcast %cst_18 : f32 to vector<8x128xf32>
    %42 = arith.maximumf %40, %41 : vector<8x128xf32>
    %c528 = arith.constant 528 : index
    %c0_19 = arith.constant 0 : index
    %43 = vector.load %arg2[%c528, %c0_19] : memref<912x128xf32, #tpu.memory_space<vmem>>, vector<128x128xf32>
    %cst_20 = arith.constant dense<0.000000e+00> : vector<8x128xf32>
    %44 = tpu.matmul %42, %43, %cst_20 {dimension_numbers = #tpu.dot_dimension_numbers<[1], [0], [0], [1], [0, 0, 1, 1], [], []>} : vector<8x128xf32>, vector<128x128xf32>, vector<8x128xf32> -> vector<8x128xf32>
    %c5 = arith.constant 5 : index
    %c0_21 = arith.constant 0 : index
    %45 = vector.load %arg3[%c5, %c0_21] : memref<16x128xf32, #tpu.memory_space<vmem>>, vector<1x128xf32>
    %46 = vector.broadcast %45 : vector<1x128xf32> to vector<8x128xf32>
    %47 = arith.addf %44, %46 : vector<8x128xf32>
    %48 = arith.addf %35, %47 : vector<8x128xf32>
    %c6 = arith.constant 6 : index
    %c0_22 = arith.constant 0 : index
    %49 = vector.load %arg3[%c6, %c0_22] : memref<16x128xf32, #tpu.memory_space<vmem>>, vector<1x128xf32>
    %c7 = arith.constant 7 : index
    %c0_23 = arith.constant 0 : index
    %50 = vector.load %arg3[%c7, %c0_23] : memref<16x128xf32, #tpu.memory_space<vmem>>, vector<1x128xf32>
    %cst_24 = arith.constant dense<0.000000e+00> : vector<8xf32>
    %51 = vector.multi_reduction <add>, %48, %cst_24 [1] : vector<8x128xf32> to vector<8xf32>
    %52 = vector.shape_cast %51 : vector<8xf32> to vector<8x1xf32>
    %cst_25 = arith.constant 3.125000e-02 : f32
    %53 = vector.broadcast %cst_25 : f32 to vector<8x1xf32>
    %54 = arith.mulf %52, %53 : vector<8x1xf32>
    %55 = arith.mulf %48, %48 : vector<8x128xf32>
    %cst_26 = arith.constant dense<0.000000e+00> : vector<8xf32>
    %56 = vector.multi_reduction <add>, %55, %cst_26 [1] : vector<8x128xf32> to vector<8xf32>
    %57 = vector.shape_cast %56 : vector<8xf32> to vector<8x1xf32>
    %cst_27 = arith.constant 3.125000e-02 : f32
    %58 = vector.broadcast %cst_27 : f32 to vector<8x1xf32>
    %59 = arith.mulf %57, %58 : vector<8x1xf32>
    %60 = arith.mulf %54, %54 : vector<8x1xf32>
    %61 = arith.subf %59, %60 : vector<8x1xf32>
    %62 = vector.broadcast %54 : vector<8x1xf32> to vector<8x128xf32>
    %63 = arith.subf %48, %62 : vector<8x128xf32>
    %cst_28 = arith.constant 9.99999974E-6 : f32
    %64 = vector.broadcast %cst_28 : f32 to vector<8x1xf32>
    %65 = arith.addf %61, %64 : vector<8x1xf32>
    %66 = math.rsqrt %65 : vector<8x1xf32>
    %67 = vector.broadcast %66 : vector<8x1xf32> to vector<8x128xf32>
    %68 = arith.mulf %63, %67 : vector<8x128xf32>
    %69 = vector.broadcast %49 : vector<1x128xf32> to vector<8x128xf32>
    %70 = arith.mulf %68, %69 : vector<8x128xf32>
    %71 = vector.broadcast %50 : vector<1x128xf32> to vector<8x128xf32>
    %72 = arith.addf %70, %71 : vector<8x128xf32>
    %c144 = arith.constant 144 : index
    %c0_29 = arith.constant 0 : index
    %73 = vector.load %arg2[%c144, %c0_29] : memref<912x128xf32, #tpu.memory_space<vmem>>, vector<128x128xf32>
    %cst_30 = arith.constant dense<0.000000e+00> : vector<8x128xf32>
    %74 = tpu.matmul %72, %73, %cst_30 {dimension_numbers = #tpu.dot_dimension_numbers<[1], [0], [0], [1], [0, 0, 1, 1], [], []>} : vector<8x128xf32>, vector<128x128xf32>, vector<8x128xf32> -> vector<8x128xf32>
    %c8 = arith.constant 8 : index
    %c0_31 = arith.constant 0 : index
    %75 = vector.load %arg3[%c8, %c0_31] : memref<16x128xf32, #tpu.memory_space<vmem>>, vector<1x128xf32>
    %76 = vector.broadcast %75 : vector<1x128xf32> to vector<8x128xf32>
    %77 = arith.addf %74, %76 : vector<8x128xf32>
    %78 = arith.addf %72, %77 : vector<8x128xf32>
    %c9 = arith.constant 9 : index
    %c0_32 = arith.constant 0 : index
    %79 = vector.load %arg3[%c9, %c0_32] : memref<16x128xf32, #tpu.memory_space<vmem>>, vector<1x128xf32>
    %c10 = arith.constant 10 : index
    %c0_33 = arith.constant 0 : index
    %80 = vector.load %arg3[%c10, %c0_33] : memref<16x128xf32, #tpu.memory_space<vmem>>, vector<1x128xf32>
    %cst_34 = arith.constant dense<0.000000e+00> : vector<8xf32>
    %81 = vector.multi_reduction <add>, %78, %cst_34 [1] : vector<8x128xf32> to vector<8xf32>
    %82 = vector.shape_cast %81 : vector<8xf32> to vector<8x1xf32>
    %cst_35 = arith.constant 3.125000e-02 : f32
    %83 = vector.broadcast %cst_35 : f32 to vector<8x1xf32>
    %84 = arith.mulf %82, %83 : vector<8x1xf32>
    %85 = arith.mulf %78, %78 : vector<8x128xf32>
    %cst_36 = arith.constant dense<0.000000e+00> : vector<8xf32>
    %86 = vector.multi_reduction <add>, %85, %cst_36 [1] : vector<8x128xf32> to vector<8xf32>
    %87 = vector.shape_cast %86 : vector<8xf32> to vector<8x1xf32>
    %cst_37 = arith.constant 3.125000e-02 : f32
    %88 = vector.broadcast %cst_37 : f32 to vector<8x1xf32>
    %89 = arith.mulf %87, %88 : vector<8x1xf32>
    %90 = arith.mulf %84, %84 : vector<8x1xf32>
    %91 = arith.subf %89, %90 : vector<8x1xf32>
    %92 = vector.broadcast %84 : vector<8x1xf32> to vector<8x128xf32>
    %93 = arith.subf %78, %92 : vector<8x128xf32>
    %cst_38 = arith.constant 9.99999974E-6 : f32
    %94 = vector.broadcast %cst_38 : f32 to vector<8x1xf32>
    %95 = arith.addf %91, %94 : vector<8x1xf32>
    %96 = math.rsqrt %95 : vector<8x1xf32>
    %97 = vector.broadcast %96 : vector<8x1xf32> to vector<8x128xf32>
    %98 = arith.mulf %93, %97 : vector<8x128xf32>
    %99 = vector.broadcast %79 : vector<1x128xf32> to vector<8x128xf32>
    %100 = arith.mulf %98, %99 : vector<8x128xf32>
    %101 = vector.broadcast %80 : vector<1x128xf32> to vector<8x128xf32>
    %102 = arith.addf %100, %101 : vector<8x128xf32>
    %c400 = arith.constant 400 : index
    %c0_39 = arith.constant 0 : index
    %103 = vector.load %arg2[%c400, %c0_39] : memref<912x128xf32, #tpu.memory_space<vmem>>, vector<128x128xf32>
    %cst_40 = arith.constant dense<0.000000e+00> : vector<8x128xf32>
    %104 = tpu.matmul %102, %103, %cst_40 {dimension_numbers = #tpu.dot_dimension_numbers<[1], [0], [0], [1], [0, 0, 1, 1], [], []>} : vector<8x128xf32>, vector<128x128xf32>, vector<8x128xf32> -> vector<8x128xf32>
    %c11 = arith.constant 11 : index
    %c0_41 = arith.constant 0 : index
    %105 = vector.load %arg3[%c11, %c0_41] : memref<16x128xf32, #tpu.memory_space<vmem>>, vector<1x128xf32>
    %106 = vector.broadcast %105 : vector<1x128xf32> to vector<8x128xf32>
    %107 = arith.addf %104, %106 : vector<8x128xf32>
    %cst_42 = arith.constant 0.000000e+00 : f32
    %108 = vector.broadcast %cst_42 : f32 to vector<8x128xf32>
    %109 = arith.maximumf %107, %108 : vector<8x128xf32>
    %c656 = arith.constant 656 : index
    %c0_43 = arith.constant 0 : index
    %110 = vector.load %arg2[%c656, %c0_43] : memref<912x128xf32, #tpu.memory_space<vmem>>, vector<128x128xf32>
    %cst_44 = arith.constant dense<0.000000e+00> : vector<8x128xf32>
    %111 = tpu.matmul %109, %110, %cst_44 {dimension_numbers = #tpu.dot_dimension_numbers<[1], [0], [0], [1], [0, 0, 1, 1], [], []>} : vector<8x128xf32>, vector<128x128xf32>, vector<8x128xf32> -> vector<8x128xf32>
    %c12 = arith.constant 12 : index
    %c0_45 = arith.constant 0 : index
    %112 = vector.load %arg3[%c12, %c0_45] : memref<16x128xf32, #tpu.memory_space<vmem>>, vector<1x128xf32>
    %113 = vector.broadcast %112 : vector<1x128xf32> to vector<8x128xf32>
    %114 = arith.addf %111, %113 : vector<8x128xf32>
    %115 = arith.addf %102, %114 : vector<8x128xf32>
    %c13 = arith.constant 13 : index
    %c0_46 = arith.constant 0 : index
    %116 = vector.load %arg3[%c13, %c0_46] : memref<16x128xf32, #tpu.memory_space<vmem>>, vector<1x128xf32>
    %c14 = arith.constant 14 : index
    %c0_47 = arith.constant 0 : index
    %117 = vector.load %arg3[%c14, %c0_47] : memref<16x128xf32, #tpu.memory_space<vmem>>, vector<1x128xf32>
    %cst_48 = arith.constant dense<0.000000e+00> : vector<8xf32>
    %118 = vector.multi_reduction <add>, %115, %cst_48 [1] : vector<8x128xf32> to vector<8xf32>
    %119 = vector.shape_cast %118 : vector<8xf32> to vector<8x1xf32>
    %cst_49 = arith.constant 3.125000e-02 : f32
    %120 = vector.broadcast %cst_49 : f32 to vector<8x1xf32>
    %121 = arith.mulf %119, %120 : vector<8x1xf32>
    %122 = arith.mulf %115, %115 : vector<8x128xf32>
    %cst_50 = arith.constant dense<0.000000e+00> : vector<8xf32>
    %123 = vector.multi_reduction <add>, %122, %cst_50 [1] : vector<8x128xf32> to vector<8xf32>
    %124 = vector.shape_cast %123 : vector<8xf32> to vector<8x1xf32>
    %cst_51 = arith.constant 3.125000e-02 : f32
    %125 = vector.broadcast %cst_51 : f32 to vector<8x1xf32>
    %126 = arith.mulf %124, %125 : vector<8x1xf32>
    %127 = arith.mulf %121, %121 : vector<8x1xf32>
    %128 = arith.subf %126, %127 : vector<8x1xf32>
    %129 = vector.broadcast %121 : vector<8x1xf32> to vector<8x128xf32>
    %130 = arith.subf %115, %129 : vector<8x128xf32>
    %cst_52 = arith.constant 9.99999974E-6 : f32
    %131 = vector.broadcast %cst_52 : f32 to vector<8x1xf32>
    %132 = arith.addf %128, %131 : vector<8x1xf32>
    %133 = math.rsqrt %132 : vector<8x1xf32>
    %134 = vector.broadcast %133 : vector<8x1xf32> to vector<8x128xf32>
    %135 = arith.mulf %130, %134 : vector<8x128xf32>
    %136 = vector.broadcast %116 : vector<1x128xf32> to vector<8x128xf32>
    %137 = arith.mulf %135, %136 : vector<8x128xf32>
    %138 = vector.broadcast %117 : vector<1x128xf32> to vector<8x128xf32>
    %139 = arith.addf %137, %138 : vector<8x128xf32>
    %c784 = arith.constant 784 : index
    %c0_53 = arith.constant 0 : index
    %140 = vector.load %arg2[%c784, %c0_53] : memref<912x128xf32, #tpu.memory_space<vmem>>, vector<128x128xf32>
    %cst_54 = arith.constant dense<0.000000e+00> : vector<8x128xf32>
    %141 = tpu.matmul %139, %140, %cst_54 {dimension_numbers = #tpu.dot_dimension_numbers<[1], [0], [0], [1], [0, 0, 1, 1], [], []>} : vector<8x128xf32>, vector<128x128xf32>, vector<8x128xf32> -> vector<8x128xf32>
    %c15 = arith.constant 15 : index
    %c0_55 = arith.constant 0 : index
    %142 = vector.load %arg3[%c15, %c0_55] : memref<16x128xf32, #tpu.memory_space<vmem>>, vector<1x128xf32>
    %143 = vector.broadcast %142 : vector<1x128xf32> to vector<8x128xf32>
    %144 = arith.addf %141, %143 : vector<8x128xf32>
    %c0_56 = arith.constant 0 : index
    %c0_57 = arith.constant 0 : index
    %145 = vector.load %arg4[%c0_56, %c0_57] : memref<8x128xf32, #tpu.memory_space<vmem>>, vector<8x128xf32>
    tpu.vector_store %arg4[%c0_56, %c0_57], %144 {strides = array<i32>} : memref<8x128xf32, #tpu.memory_space<vmem>>, vector<8x128xf32>,
    return
  }
  func.func @transform_0(%arg0: i32) -> (i32, i32) {
    %c0_i32 = arith.constant 0 : i32
    %c0_i32_0 = arith.constant 0 : i32
    return %arg0, %c0_i32 : i32, i32
  }
  func.func @transform_1(%arg0: i32) -> (i32, i32) {
    %c0_i32 = arith.constant 0 : i32
    %c0_i32_0 = arith.constant 0 : i32
    %c0_i32_1 = arith.constant 0 : i32
    return %c0_i32, %c0_i32_0 : i32, i32
  }
  func.func @transform_2(%arg0: i32) -> (i32, i32) {
    %c0_i32 = arith.constant 0 : i32
    %c0_i32_0 = arith.constant 0 : i32
    %c0_i32_1 = arith.constant 0 : i32
    return %c0_i32, %c0_i32_0 : i32, i32
  }
  func.func @transform_3(%arg0: i32) -> (i32, i32) {
    %c0_i32 = arith.constant 0 : i32
    %c0_i32_0 = arith.constant 0 : i32
    return %arg0, %c0_i32 : i32, i32
  }
}

</mosaic_0001>

<llo_original>
// kernel: tpu_custom_call.1
$region0: #{tpu_custom_call.1}
  #allocation0 [shape = 'u32[]', space=smem, size = 0x4, offset = 0x4, fixed_abs, tag = 'smem constant byte address 0x4 - core index']
  #allocation1 [shape = 'u32[144,128]{1,0:T(1,128)}', space=vmem, size = 0x12000, scoped, tag = 'internal scratch']
  %s0 = inlined_call_operand.hbm [shape: f32[8,16], index: 0, kind: input, shape index: {}]
  %s1 = inlined_call_operand.hbm [shape: f32[912,128], index: 1, kind: input, shape index: {}]
  %s2 = inlined_call_operand.hbm [shape: f32[16,128], index: 2, kind: input, shape index: {}]
  %s3 = inlined_call_operand.hbm [shape: f32[8,128], index: 3, kind: output, shape index: {}]
  %s4 = sld [smem:[#allocation0]]
  $region34: #{tpu_custom_call.1} parent=0
    _
  %s6 = ssub.s32 1, %s4
  %s7 = scalar_select 0, %s6, %s4
  $region1: #{tpu_custom_call.1} parent=0
    #allocation2 [shape = 'u8[4096]{0}', space=vmem, size = 0x1000, scoped, tag = 'input window, operand 0, single buffered']
    #allocation3 [shape = 's32[1]{0}', space=sflag, size = 0x4, scoped, tag = 'scoped memory for tpu_custom_call.1']
    #allocation4 [shape = 's32[1]{0}', space=sflag, size = 0x4, scoped, tag = 'scoped memory for tpu_custom_call.1']
    #allocation5 [shape = 'u8[466944]{0}', space=vmem, size = 0x72000, scoped, tag = 'input window, operand 1, single buffered']
    #allocation6 [shape = 's32[1]{0}', space=sflag, size = 0x4, scoped, tag = 'scoped memory for tpu_custom_call.1']
    #allocation7 [shape = 'u8[8192]{0}', space=vmem, size = 0x2000, scoped, tag = 'input window, operand 2, single buffered']
    #allocation8 [shape = 'u8[4096]{0}', space=vmem, size = 0x1000, scoped, tag = 'output window, operand 0, single buffered']
    %8 = vsyncpa [#allocation3], 0
    %9 = vsyncpa [#allocation6], 0
    %10 = vsyncpa [#allocation4], 0
    // Predicated region
    $region2: #{tpu_custom_call.1} parent=1 // pred_check
      _
    $region3: #{tpu_custom_call.1} parent=1 // pred_check_branch
      %12 = sbr.rel (0) target = $region5
    $region4: #{tpu_custom_call.1} parent=1 // pred_region
      %s14 = ssub.s32 128, 128
      %15 = vsyncadd [#allocation3], %s14
      %s17 = sshll.u32 [#allocation2], 4
      %s18 = int_to_ptr.vmem [resolvable:$true] %s17
      %20 = dma.hbm_to_vmem [thread:$0]  %s0, 128, %s18, [#allocation3]
    $region5: #{tpu_custom_call.1} parent=1 // pred_fallthru
      _
    // Predicated region
    $region6: #{tpu_custom_call.1} parent=1 // pred_check
      _
    $region7: #{tpu_custom_call.1} parent=1 // pred_check_branch
      %22 = sbr.rel (0) target = $region9
    $region8: #{tpu_custom_call.1} parent=1 // pred_region
      %s24 = ssub.s32 14592, 14592
      %25 = vsyncadd [#allocation6], %s24
      %s26 = sshll.u32 [#allocation5], 4
      %s27 = int_to_ptr.vmem [resolvable:$true] %s26
      %32 = dma.hbm_to_vmem [thread:$0]  %s1, 14592, %s27, [#allocation6], 128, 128, 8
    $region9: #{tpu_custom_call.1} parent=1 // pred_fallthru
      _
    // Predicated region
    $region10: #{tpu_custom_call.1} parent=1 // pred_check
      _
    $region11: #{tpu_custom_call.1} parent=1 // pred_check_branch
      %34 = sbr.rel (0) target = $region13
    $region12: #{tpu_custom_call.1} parent=1 // pred_region
      %s36 = ssub.s32 256, 256
      %37 = vsyncadd [#allocation6], %s36
      %s38 = sshll.u32 [#allocation7], 4
      %s39 = int_to_ptr.vmem [resolvable:$true] %s38
      %44 = dma.hbm_to_vmem [thread:$0]  %s2, 256, %s39, [#allocation6], 128, 128, 8
    $region13: #{tpu_custom_call.1} parent=1 // pred_fallthru
      _
    // Predicated region
    $region14: #{tpu_custom_call.1} parent=1 // pred_check
      _
    $region15: #{tpu_custom_call.1} parent=1 // pred_check_branch
      %46 = sbr.rel (0) target = $region17
    $region16: #{tpu_custom_call.1} parent=1 // pred_region
      %47 = dma.done [#allocation3], 128
    $region17: #{tpu_custom_call.1} parent=1 // pred_fallthru
      _
    // Predicated region
    $region18: #{tpu_custom_call.1} parent=1 // pred_check
      _
    $region19: #{tpu_custom_call.1} parent=1 // pred_check_branch
      %49 = sbr.rel (0) target = $region21
    $region20: #{tpu_custom_call.1} parent=1 // pred_region
      %50 = dma.done [#allocation6], 14592
    $region21: #{tpu_custom_call.1} parent=1 // pred_fallthru
      _
    // Predicated region
    $region22: #{tpu_custom_call.1} parent=1 // pred_check
      _
    $region23: #{tpu_custom_call.1} parent=1 // pred_check_branch
      %52 = sbr.rel (0) target = $region25
    $region24: #{tpu_custom_call.1} parent=1 // pred_region
      %53 = dma.done [#allocation6], 256
    $region25: #{tpu_custom_call.1} parent=1 // pred_fallthru
      _
    %v54 = vld [vmem:[#allocation2] sm:$0xff]
    %v55 = vld [vmem:[#allocation5] sm:$0xff]
    %v56 = vld [vmem:[#allocation5 + $0x8] sm:$0xff]
    %v57 = vld [vmem:[#allocation7] sm:$0x1]
    %v58 = vlaneseq
    %v59 = vshrl.u32 %v58, 7
    %v60 = vsub.s32 0, %v59
    %v61 = vrot.slane %v57, %v60
    %vm62 = vcmask 130048
    %v64 = vsel %vm62, %v54, 0
    %66 = vmatprep.subr.mxu0 0.0
    %67 = vmatpush1.msra.mxu0 %v55
    %68 = vmatprep.subr.mxu0 0.0
    %69 = vmatpush1.msra.mxu0 %v56
    %70 = vmatprep.subr.mxu0 0.0
    %71 = vmatpush1.msra.mxu0 0.0
    %72 = vmatprep.subr.mxu0 0.0
    %73 = vmatpush1.msra.mxu0 0.0
    %74 = vmatprep.subr.mxu0 0.0
    %75 = vmatpush1.msra.mxu0 0.0
    %76 = vmatprep.subr.mxu0 0.0
    %77 = vmatpush1.msra.mxu0 0.0
    %78 = vmatprep.subr.mxu0 0.0
    %79 = vmatpush1.msra.mxu0 0.0
    %80 = vmatprep.subr.mxu0 0.0
    %81 = vmatpush1.msra.mxu0 0.0
    %82 = vmatprep.subr.mxu0 0.0
    %83 = vmatpush1.msra.mxu0 0.0
    %84 = vmatprep.subr.mxu0 0.0
    %85 = vmatpush1.msra.mxu0 0.0
    %86 = vmatprep.subr.mxu0 0.0
    %87 = vmatpush1.msra.mxu0 0.0
    %88 = vmatprep.subr.mxu0 0.0
    %89 = vmatpush1.msra.mxu0 0.0
    %90 = vmatprep.subr.mxu0 0.0
    %91 = vmatpush1.msra.mxu0 0.0
    %92 = vmatprep.subr.mxu0 0.0
    %93 = vmatpush1.msra.mxu0 0.0
    %94 = vmatprep.subr.mxu0 0.0
    %95 = vmatpush1.msra.mxu0 0.0
    %96 = vmatprep.subr.mxu0 0.0
    %97 = vmatpush1.msra.mxu0 0.0
    %98 = vmatprep.subr.mxu0 0.0
    %99 = vmatpush1.msra.mxu0 0.0
    %100 = vmatprep.subr.mxu0 0.0
    %101 = vmatpush1.msra.mxu0 0.0
    %102 = vmatprep.subr.mxu0 0.0
    %103 = vmatpush1.msra.mxu0 0.0
    %104 = vmatprep.subr.mxu0 0.0
    %105 = vmatpush1.msra.mxu0 0.0
    %106 = vmatprep.subr.mxu0 0.0
    %107 = vmatpush1.msra.mxu0 0.0
    %108 = vmatprep.subr.mxu0 0.0
    %109 = vmatpush1.msra.mxu0 0.0
    %110 = vmatprep.subr.mxu0 0.0
    %111 = vmatpush1.msra.mxu0 0.0
    %112 = vmatprep.subr.mxu0 0.0
    %113 = vmatpush1.msra.mxu0 0.0
    %114 = vmatprep.subr.mxu0 0.0
    %115 = vmatpush1.msra.mxu0 0.0
    %116 = vmatprep.subr.mxu0 0.0
    %117 = vmatpush1.msra.mxu0 0.0
    %118 = vmatprep.subr.mxu0 0.0
    %119 = vmatpush1.msra.mxu0 0.0
    %120 = vmatprep.subr.mxu0 0.0
    %121 = vmatpush1.msra.mxu0 0.0
    %122 = vmatprep.subr.mxu0 0.0
    %123 = vmatpush1.msra.mxu0 0.0
    %124 = vmatprep.subr.mxu0 0.0
    %125 = vmatpush1.msra.mxu0 0.0
    %126 = vmatprep.subr.mxu0 0.0
    %127 = vmatpush1.msra.mxu0 0.0
    %128 = vmatprep.subr.mxu0 0.0
    %129 = vmatpush1.msra.mxu0 0.0
    %130 = vmatprep.mubr.f32.mxu0 0.0
    %131 = vmatmul.mubr.f32.gmra.mrb[0].mxu0 %v64
    %v132 = vpop.f32.mrb[0].mxu0
    %v133 = vadd.f32 %v61, %v132
    %v134 = vpop.f32.mrb[0].mxu0
    %135 = vdwg.mxu0
    %v136 = vld [vmem:[#allocation5 + $0x10] sm:$0xff]
    %v137 = vld [vmem:[#allocation5 + $0x18] sm:$0xff]
    %v138 = vld [vmem:[#allocation5 + $0x20] sm:$0xff]
    %v139 = vld [vmem:[#allocation5 + $0x28] sm:$0xff]
    %v140 = vld [vmem:[#allocation5 + $0x30] sm:$0xff]
    %v141 = vld [vmem:[#allocation5 + $0x38] sm:$0xff]
    %v142 = vld [vmem:[#allocation5 + $0x40] sm:$0xff]
    %v143 = vld [vmem:[#allocation5 + $0x48] sm:$0xff]
    %v144 = vld [vmem:[#allocation5 + $0x50] sm:$0xff]
    %v145 = vld [vmem:[#allocation5 + $0x58] sm:$0xff]
    %v146 = vld [vmem:[#allocation5 + $0x60] sm:$0xff]
    %v147 = vld [vmem:[#allocation5 + $0x68] sm:$0xff]
    %v148 = vld [vmem:[#allocation5 + $0x70] sm:$0xff]
    %v149 = vld [vmem:[#allocation5 + $0x78] sm:$0xff]
    %v150 = vld [vmem:[#allocation5 + $0x80] sm:$0xff]
    %v151 = vld [vmem:[#allocation5 + $0x88] sm:$0xff]
    %v152 = vld [vmem:[#allocation7 + $0x1] sm:$0x1]
    %v153 = vlaneseq
    %v154 = vshrl.u32 %v153, 7
    %v155 = vsub.s32 0, %v154
    %v156 = vrot.slane %v152, %v155
    %157 = vmatprep.subr.mxu0 0.0
    %158 = vmatpush1.msra.mxu0 %v136
    %159 = vmatprep.subr.mxu0 0.0
    %160 = vmatpush1.msra.mxu0 %v137
    %161 = vmatprep.subr.mxu0 0.0
    %162 = vmatpush1.msra.mxu0 %v138
    %163 = vmatprep.subr.mxu0 0.0
    %164 = vmatpush1.msra.mxu0 %v139
    %165 = vmatprep.subr.mxu0 0.0
    %166 = vmatpush1.msra.mxu0 %v140
    %167 = vmatprep.subr.mxu0 0.0
    %168 = vmatpush1.msra.mxu0 %v141
    %169 = vmatprep.subr.mxu0 0.0
    %170 = vmatpush1.msra.mxu0 %v142
    %171 = vmatprep.subr.mxu0 0.0
    %172 = vmatpush1.msra.mxu0 %v143
    %173 = vmatprep.subr.mxu0 0.0
    %174 = vmatpush1.msra.mxu0 %v144
    %175 = vmatprep.subr.mxu0 0.0
    %176 = vmatpush1.msra.mxu0 %v145
    %177 = vmatprep.subr.mxu0 0.0
    %178 = vmatpush1.msra.mxu0 %v146
    %179 = vmatprep.subr.mxu0 0.0
    %180 = vmatpush1.msra.mxu0 %v147
    %181 = vmatprep.subr.mxu0 0.0
    %182 = vmatpush1.msra.mxu0 %v148
    %183 = vmatprep.subr.mxu0 0.0
    %184 = vmatpush1.msra.mxu0 %v149
    %185 = vmatprep.subr.mxu0 0.0
    %186 = vmatpush1.msra.mxu0 %v150
    %187 = vmatprep.subr.mxu0 0.0
    %188 = vmatpush1.msra.mxu0 %v151
    %189 = vmatprep.subr.mxu0 0.0
    %190 = vmatpush1.msra.mxu0 0.0
    %191 = vmatprep.subr.mxu0 0.0
    %192 = vmatpush1.msra.mxu0 0.0
    %193 = vmatprep.subr.mxu0 0.0
    %194 = vmatpush1.msra.mxu0 0.0
    %195 = vmatprep.subr.mxu0 0.0
    %196 = vmatpush1.msra.mxu0 0.0
    %197 = vmatprep.subr.mxu0 0.0
    %198 = vmatpush1.msra.mxu0 0.0
    %199 = vmatprep.subr.mxu0 0.0
    %200 = vmatpush1.msra.mxu0 0.0
    %201 = vmatprep.subr.mxu0 0.0
    %202 = vmatpush1.msra.mxu0 0.0
    %203 = vmatprep.subr.mxu0 0.0
    %204 = vmatpush1.msra.mxu0 0.0
    %205 = vmatprep.subr.mxu0 0.0
    %206 = vmatpush1.msra.mxu0 0.0
    %207 = vmatprep.subr.mxu0 0.0
    %208 = vmatpush1.msra.mxu0 0.0
    %209 = vmatprep.subr.mxu0 0.0
    %210 = vmatpush1.msra.mxu0 0.0
    %211 = vmatprep.subr.mxu0 0.0
    %212 = vmatpush1.msra.mxu0 0.0
    %213 = vmatprep.subr.mxu0 0.0
    %214 = vmatpush1.msra.mxu0 0.0
    %215 = vmatprep.subr.mxu0 0.0
    %216 = vmatpush1.msra.mxu0 0.0
    %217 = vmatprep.subr.mxu0 0.0
    %218 = vmatpush1.msra.mxu0 0.0
    %219 = vmatprep.subr.mxu0 0.0
    %220 = vmatpush1.msra.mxu0 0.0
    %221 = vmatprep.mubr.f32.mxu0 0.0
    %222 = vmatmul.mubr.f32.gmra.mrb[0].mxu0 %v133
    %v223 = vpop.f32.mrb[0].mxu0
    %v224 = vadd.f32 %v156, %v223
    %v225 = vpop.f32.mrb[0].mxu0
    %226 = vdwg.mxu0
    %v227 = vadd.f32 %v133, %v224
    %v228 = vld [vmem:[#allocation7 + $0x2] sm:$0x1]
    %v229 = vld [vmem:[#allocation7 + $0x3] sm:$0x1]
    %230 = vadd.xlane.f32.xlu0 %v227
    %v231 = vpop.xlane.xlu0 %230
    %v232 = vmul.f32 %v231, 0.03125
    %v233 = vmul.f32 %v227, %v227
    %234 = vadd.xlane.f32.xlu0 %v233
    %v235 = vpop.xlane.xlu0 %234
    %v236 = vmul.f32 %v235, 0.03125
    %v237 = vmul.f32 %v232, %v232
    %v238 = vsub.f32 %v236, %v237
    %v239 = vsub.f32 %v227, %v232
    %v240 = vadd.f32 %v238, 1e-05
    %v241 = vrsqrt.pop %v240
    %v242 = vmul.f32 %v239, %v241
    %v243 = vlaneseq
    %v244 = vshrl.u32 %v243, 7
    %v245 = vsub.s32 0, %v244
    %v246 = vrot.slane %v228, %v245
    %v247 = vmul.f32 %v242, %v246
    %v248 = vlaneseq
    %v249 = vshrl.u32 %v248, 7
    %v250 = vsub.s32 0, %v249
    %v251 = vrot.slane %v229, %v250
    %v252 = vadd.f32 %v247, %v251
    %v253 = vld [vmem:[#allocation5 + $0x110] sm:$0xff]
    %v254 = vld [vmem:[#allocation5 + $0x118] sm:$0xff]
    %v255 = vld [vmem:[#allocation5 + $0x120] sm:$0xff]
    %v256 = vld [vmem:[#allocation5 + $0x128] sm:$0xff]
    %v257 = vld [vmem:[#allocation5 + $0x130] sm:$0xff]
    %v258 = vld [vmem:[#allocation5 + $0x138] sm:$0xff]
    %v259 = vld [vmem:[#allocation5 + $0x140] sm:$0xff]
    %v260 = vld [vmem:[#allocation5 + $0x148] sm:$0xff]
    %v261 = vld [vmem:[#allocation5 + $0x150] sm:$0xff]
    %v262 = vld [vmem:[#allocation5 + $0x158] sm:$0xff]
    %v263 = vld [vmem:[#allocation5 + $0x160] sm:$0xff]
    %v264 = vld [vmem:[#allocation5 + $0x168] sm:$0xff]
    %v265 = vld [vmem:[#allocation5 + $0x170] sm:$0xff]
    %v266 = vld [vmem:[#allocation5 + $0x178] sm:$0xff]
    %v267 = vld [vmem:[#allocation5 + $0x180] sm:$0xff]
    %v268 = vld [vmem:[#allocation5 + $0x188] sm:$0xff]
    %v269 = vld [vmem:[#allocation7 + $0x4] sm:$0x1]
    %v270 = vlaneseq
    %v271 = vshrl.u32 %v270, 7
    %v272 = vsub.s32 0, %v271
    %v273 = vrot.slane %v269, %v272
    %274 = vmatprep.subr.mxu0 0.0
    %275 = vmatpush1.msra.mxu0 %v253
    %276 = vmatprep.subr.mxu0 0.0
    %277 = vmatpush1.msra.mxu0 %v254
    %278 = vmatprep.subr.mxu0 0.0
    %279 = vmatpush1.msra.mxu0 %v255
    %280 = vmatprep.subr.mxu0 0.0
    %281 = vmatpush1.msra.mxu0 %v256
    %282 = vmatprep.subr.mxu0 0.0
    %283 = vmatpush1.msra.mxu0 %v257
    %284 = vmatprep.subr.mxu0 0.0
    %285 = vmatpush1.msra.mxu0 %v258
    %286 = vmatprep.subr.mxu0 0.0
    %287 = vmatpush1.msra.mxu0 %v259
    %288 = vmatprep.subr.mxu0 0.0
    %289 = vmatpush1.msra.mxu0 %v260
    %290 = vmatprep.subr.mxu0 0.0
    %291 = vmatpush1.msra.mxu0 %v261
    %292 = vmatprep.subr.mxu0 0.0
    %293 = vmatpush1.msra.mxu0 %v262
    %294 = vmatprep.subr.mxu0 0.0
    %295 = vmatpush1.msra.mxu0 %v263
    %296 = vmatprep.subr.mxu0 0.0
    %297 = vmatpush1.msra.mxu0 %v264
    %298 = vmatprep.subr.mxu0 0.0
    %299 = vmatpush1.msra.mxu0 %v265
    %300 = vmatprep.subr.mxu0 0.0
    %301 = vmatpush1.msra.mxu0 %v266
    %302 = vmatprep.subr.mxu0 0.0
    %303 = vmatpush1.msra.mxu0 %v267
    %304 = vmatprep.subr.mxu0 0.0
    %305 = vmatpush1.msra.mxu0 %v268
    %306 = vmatprep.subr.mxu0 0.0
    %307 = vmatpush1.msra.mxu0 0.0
    %308 = vmatprep.subr.mxu0 0.0
    %309 = vmatpush1.msra.mxu0 0.0
    %310 = vmatprep.subr.mxu0 0.0
    %311 = vmatpush1.msra.mxu0 0.0
    %312 = vmatprep.subr.mxu0 0.0
    %313 = vmatpush1.msra.mxu0 0.0
    %314 = vmatprep.subr.mxu0 0.0
    %315 = vmatpush1.msra.mxu0 0.0
    %316 = vmatprep.subr.mxu0 0.0
    %317 = vmatpush1.msra.mxu0 0.0
    %318 = vmatprep.subr.mxu0 0.0
    %319 = vmatpush1.msra.mxu0 0.0
    %320 = vmatprep.subr.mxu0 0.0
    %321 = vmatpush1.msra.mxu0 0.0
    %322 = vmatprep.subr.mxu0 0.0
    %323 = vmatpush1.msra.mxu0 0.0
    %324 = vmatprep.subr.mxu0 0.0
    %325 = vmatpush1.msra.mxu0 0.0
    %326 = vmatprep.subr.mxu0 0.0
    %327 = vmatpush1.msra.mxu0 0.0
    %328 = vmatprep.subr.mxu0 0.0
    %329 = vmatpush1.msra.mxu0 0.0
    %330 = vmatprep.subr.mxu0 0.0
    %331 = vmatpush1.msra.mxu0 0.0
    %332 = vmatprep.subr.mxu0 0.0
    %333 = vmatpush1.msra.mxu0 0.0
    %334 = vmatprep.subr.mxu0 0.0
    %335 = vmatpush1.msra.mxu0 0.0
    %336 = vmatprep.subr.mxu0 0.0
    %337 = vmatpush1.msra.mxu0 0.0
    %338 = vmatprep.mubr.f32.mxu0 0.0
    %339 = vmatmul.mubr.f32.gmra.mrb[0].mxu0 %v252
    %v340 = vpop.f32.mrb[0].mxu0
    %v341 = vadd.f32 %v273, %v340
    %v342 = vpop.f32.mrb[0].mxu0
    %343 = vdwg.mxu0
    %v344 = vmax.f32 %v341, 0.0
    %v345 = vld [vmem:[#allocation5 + $0x210] sm:$0xff]
    %v346 = vld [vmem:[#allocation5 + $0x218] sm:$0xff]
    %v347 = vld [vmem:[#allocation5 + $0x220] sm:$0xff]
    %v348 = vld [vmem:[#allocation5 + $0x228] sm:$0xff]
    %v349 = vld [vmem:[#allocation5 + $0x230] sm:$0xff]
    %v350 = vld [vmem:[#allocation5 + $0x238] sm:$0xff]
    %v351 = vld [vmem:[#allocation5 + $0x240] sm:$0xff]
    %v352 = vld [vmem:[#allocation5 + $0x248] sm:$0xff]
    %v353 = vld [vmem:[#allocation5 + $0x250] sm:$0xff]
    %v354 = vld [vmem:[#allocation5 + $0x258] sm:$0xff]
    %v355 = vld [vmem:[#allocation5 + $0x260] sm:$0xff]
    %v356 = vld [vmem:[#allocation5 + $0x268] sm:$0xff]
    %v357 = vld [vmem:[#allocation5 + $0x270] sm:$0xff]
    %v358 = vld [vmem:[#allocation5 + $0x278] sm:$0xff]
    %v359 = vld [vmem:[#allocation5 + $0x280] sm:$0xff]
    %v360 = vld [vmem:[#allocation5 + $0x288] sm:$0xff]
    %v361 = vld [vmem:[#allocation7 + $0x5] sm:$0x1]
    %v362 = vlaneseq
    %v363 = vshrl.u32 %v362, 7
    %v364 = vsub.s32 0, %v363
    %v365 = vrot.slane %v361, %v364
    %366 = vmatprep.subr.mxu0 0.0
    %367 = vmatpush1.msra.mxu0 %v345
    %368 = vmatprep.subr.mxu0 0.0
    %369 = vmatpush1.msra.mxu0 %v346
    %370 = vmatprep.subr.mxu0 0.0
    %371 = vmatpush1.msra.mxu0 %v347
    %372 = vmatprep.subr.mxu0 0.0
    %373 = vmatpush1.msra.mxu0 %v348
    %374 = vmatprep.subr.mxu0 0.0
    %375 = vmatpush1.msra.mxu0 %v349
    %376 = vmatprep.subr.mxu0 0.0
    %377 = vmatpush1.msra.mxu0 %v350
    %378 = vmatprep.subr.mxu0 0.0
    %379 = vmatpush1.msra.mxu0 %v351
    %380 = vmatprep.subr.mxu0 0.0
    %381 = vmatpush1.msra.mxu0 %v352
    %382 = vmatprep.subr.mxu0 0.0
    %383 = vmatpush1.msra.mxu0 %v353
    %384 = vmatprep.subr.mxu0 0.0
    %385 = vmatpush1.msra.mxu0 %v354
    %386 = vmatprep.subr.mxu0 0.0
    %387 = vmatpush1.msra.mxu0 %v355
    %388 = vmatprep.subr.mxu0 0.0
    %389 = vmatpush1.msra.mxu0 %v356
    %390 = vmatprep.subr.mxu0 0.0
    %391 = vmatpush1.msra.mxu0 %v357
    %392 = vmatprep.subr.mxu0 0.0
    %393 = vmatpush1.msra.mxu0 %v358
    %394 = vmatprep.subr.mxu0 0.0
    %395 = vmatpush1.msra.mxu0 %v359
    %396 = vmatprep.subr.mxu0 0.0
    %397 = vmatpush1.msra.mxu0 %v360
    %398 = vmatprep.subr.mxu0 0.0
    %399 = vmatpush1.msra.mxu0 0.0
    %400 = vmatprep.subr.mxu0 0.0
    %401 = vmatpush1.msra.mxu0 0.0
    %402 = vmatprep.subr.mxu0 0.0
    %403 = vmatpush1.msra.mxu0 0.0
    %404 = vmatprep.subr.mxu0 0.0
    %405 = vmatpush1.msra.mxu0 0.0
    %406 = vmatprep.subr.mxu0 0.0
    %407 = vmatpush1.msra.mxu0 0.0
    %408 = vmatprep.subr.mxu0 0.0
    %409 = vmatpush1.msra.mxu0 0.0
    %410 = vmatprep.subr.mxu0 0.0
    %411 = vmatpush1.msra.mxu0 0.0
    %412 = vmatprep.subr.mxu0 0.0
    %413 = vmatpush1.msra.mxu0 0.0
    %414 = vmatprep.subr.mxu0 0.0
    %415 = vmatpush1.msra.mxu0 0.0
    %416 = vmatprep.subr.mxu0 0.0
    %417 = vmatpush1.msra.mxu0 0.0
    %418 = vmatprep.subr.mxu0 0.0
    %419 = vmatpush1.msra.mxu0 0.0
    %420 = vmatprep.subr.mxu0 0.0
    %421 = vmatpush1.msra.mxu0 0.0
    %422 = vmatprep.subr.mxu0 0.0
    %423 = vmatpush1.msra.mxu0 0.0
    %424 = vmatprep.subr.mxu0 0.0
    %425 = vmatpush1.msra.mxu0 0.0
    %426 = vmatprep.subr.mxu0 0.0
    %427 = vmatpush1.msra.mxu0 0.0
    %428 = vmatprep.subr.mxu0 0.0
    %429 = vmatpush1.msra.mxu0 0.0
    %430 = vmatprep.mubr.f32.mxu0 0.0
    %431 = vmatmul.mubr.f32.gmra.mrb[0].mxu0 %v344
    %v432 = vpop.f32.mrb[0].mxu0
    %v433 = vadd.f32 %v365, %v432
    %v434 = vpop.f32.mrb[0].mxu0
    %435 = vdwg.mxu0
    %v436 = vadd.f32 %v252, %v433
    %v437 = vld [vmem:[#allocation7 + $0x6] sm:$0x1]
    %v438 = vld [vmem:[#allocation7 + $0x7] sm:$0x1]
    %439 = vadd.xlane.f32.xlu0 %v436
    %v440 = vpop.xlane.xlu0 %439
    %v441 = vmul.f32 %v440, 0.03125
    %v442 = vmul.f32 %v436, %v436
    %443 = vadd.xlane.f32.xlu0 %v442
    %v444 = vpop.xlane.xlu0 %443
    %v445 = vmul.f32 %v444, 0.03125
    %v446 = vmul.f32 %v441, %v441
    %v447 = vsub.f32 %v445, %v446
    %v448 = vsub.f32 %v436, %v441
    %v449 = vadd.f32 %v447, 1e-05
    %v450 = vrsqrt.pop %v449
    %v451 = vmul.f32 %v448, %v450
    %v452 = vlaneseq
    %v453 = vshrl.u32 %v452, 7
    %v454 = vsub.s32 0, %v453
    %v455 = vrot.slane %v437, %v454
    %v456 = vmul.f32 %v451, %v455
    %v457 = vlaneseq
    %v458 = vshrl.u32 %v457, 7
    %v459 = vsub.s32 0, %v458
    %v460 = vrot.slane %v438, %v459
    %v461 = vadd.f32 %v456, %v460
    %v462 = vld [vmem:[#allocation5 + $0x90] sm:$0xff]
    %v463 = vld [vmem:[#allocation5 + $0x98] sm:$0xff]
    %v464 = vld [vmem:[#allocation5 + $0xa0] sm:$0xff]
    %v465 = vld [vmem:[#allocation5 + $0xa8] sm:$0xff]
    %v466 = vld [vmem:[#allocation5 + $0xb0] sm:$0xff]
    %v467 = vld [vmem:[#allocation5 + $0xb8] sm:$0xff]
    %v468 = vld [vmem:[#allocation5 + $0xc0] sm:$0xff]
    %v469 = vld [vmem:[#allocation5 + $0xc8] sm:$0xff]
    %v470 = vld [vmem:[#allocation5 + $0xd0] sm:$0xff]
    %v471 = vld [vmem:[#allocation5 + $0xd8] sm:$0xff]
    %v472 = vld [vmem:[#allocation5 + $0xe0] sm:$0xff]
    %v473 = vld [vmem:[#allocation5 + $0xe8] sm:$0xff]
    %v474 = vld [vmem:[#allocation5 + $0xf0] sm:$0xff]
    %v475 = vld [vmem:[#allocation5 + $0xf8] sm:$0xff]
    %v476 = vld [vmem:[#allocation5 + $0x100] sm:$0xff]
    %v477 = vld [vmem:[#allocation5 + $0x108] sm:$0xff]
    %v478 = vld [vmem:[#allocation7 + $0x8] sm:$0x1]
    %v479 = vlaneseq
    %v480 = vshrl.u32 %v479, 7
    %v481 = vsub.s32 0, %v480
    %v482 = vrot.slane %v478, %v481
    %483 = vmatprep.subr.mxu0 0.0
    %484 = vmatpush1.msra.mxu0 %v462
    %485 = vmatprep.subr.mxu0 0.0
    %486 = vmatpush1.msra.mxu0 %v463
    %487 = vmatprep.subr.mxu0 0.0
    %488 = vmatpush1.msra.mxu0 %v464
    %489 = vmatprep.subr.mxu0 0.0
    %490 = vmatpush1.msra.mxu0 %v465
    %491 = vmatprep.subr.mxu0 0.0
    %492 = vmatpush1.msra.mxu0 %v466
    %493 = vmatprep.subr.mxu0 0.0
    %494 = vmatpush1.msra.mxu0 %v467
    %495 = vmatprep.subr.mxu0 0.0
    %496 = vmatpush1.msra.mxu0 %v468
    %497 = vmatprep.subr.mxu0 0.0
    %498 = vmatpush1.msra.mxu0 %v469
    %499 = vmatprep.subr.mxu0 0.0
    %500 = vmatpush1.msra.mxu0 %v470
    %501 = vmatprep.subr.mxu0 0.0
    %502 = vmatpush1.msra.mxu0 %v471
    %503 = vmatprep.subr.mxu0 0.0
    %504 = vmatpush1.msra.mxu0 %v472
    %505 = vmatprep.subr.mxu0 0.0
    %506 = vmatpush1.msra.mxu0 %v473
    %507 = vmatprep.subr.mxu0 0.0
    %508 = vmatpush1.msra.mxu0 %v474
    %509 = vmatprep.subr.mxu0 0.0
    %510 = vmatpush1.msra.mxu0 %v475
    %511 = vmatprep.subr.mxu0 0.0
    %512 = vmatpush1.msra.mxu0 %v476
    %513 = vmatprep.subr.mxu0 0.0
    %514 = vmatpush1.msra.mxu0 %v477
    %515 = vmatprep.subr.mxu0 0.0
    %516 = vmatpush1.msra.mxu0 0.0
    %517 = vmatprep.subr.mxu0 0.0
    %518 = vmatpush1.msra.mxu0 0.0
    %519 = vmatprep.subr.mxu0 0.0
    %520 = vmatpush1.msra.mxu0 0.0
    %521 = vmatprep.subr.mxu0 0.0
    %522 = vmatpush1.msra.mxu0 0.0
    %523 = vmatprep.subr.mxu0 0.0
    %524 = vmatpush1.msra.mxu0 0.0
    %525 = vmatprep.subr.mxu0 0.0
    %526 = vmatpush1.msra.mxu0 0.0
    %527 = vmatprep.subr.mxu0 0.0
    %528 = vmatpush1.msra.mxu0 0.0
    %529 = vmatprep.subr.mxu0 0.0
    %530 = vmatpush1.msra.mxu0 0.0
    %531 = vmatprep.subr.mxu0 0.0
    %532 = vmatpush1.msra.mxu0 0.0
    %533 = vmatprep.subr.mxu0 0.0
    %534 = vmatpush1.msra.mxu0 0.0
    %535 = vmatprep.subr.mxu0 0.0
    %536 = vmatpush1.msra.mxu0 0.0
    %537 = vmatprep.subr.mxu0 0.0
    %538 = vmatpush1.msra.mxu0 0.0
    %539 = vmatprep.subr.mxu0 0.0
    %540 = vmatpush1.msra.mxu0 0.0
    %541 = vmatprep.subr.mxu0 0.0
    %542 = vmatpush1.msra.mxu0 0.0
    %543 = vmatprep.subr.mxu0 0.0
    %544 = vmatpush1.msra.mxu0 0.0
    %545 = vmatprep.subr.mxu0 0.0
    %546 = vmatpush1.msra.mxu0 0.0
    %547 = vmatprep.mubr.f32.mxu0 0.0
    %548 = vmatmul.mubr.f32.gmra.mrb[0].mxu0 %v461
    %v549 = vpop.f32.mrb[0].mxu0
    %v550 = vadd.f32 %v482, %v549
    %v551 = vpop.f32.mrb[0].mxu0
    %552 = vdwg.mxu0
    %v553 = vadd.f32 %v461, %v550
    %v554 = vld [vmem:[#allocation7 + $0x9] sm:$0x1]
    %v555 = vld [vmem:[#allocation7 + $0xa] sm:$0x1]
    %556 = vadd.xlane.f32.xlu0 %v553
    %v557 = vpop.xlane.xlu0 %556
    %v558 = vmul.f32 %v557, 0.03125
    %v559 = vmul.f32 %v553, %v553
    %560 = vadd.xlane.f32.xlu0 %v559
    %v561 = vpop.xlane.xlu0 %560
    %v562 = vmul.f32 %v561, 0.03125
    %v563 = vmul.f32 %v558, %v558
    %v564 = vsub.f32 %v562, %v563
    %v565 = vsub.f32 %v553, %v558
    %v566 = vadd.f32 %v564, 1e-05
    %v567 = vrsqrt.pop %v566
    %v568 = vmul.f32 %v565, %v567
    %v569 = vlaneseq
    %v570 = vshrl.u32 %v569, 7
    %v571 = vsub.s32 0, %v570
    %v572 = vrot.slane %v554, %v571
    %v573 = vmul.f32 %v568, %v572
    %v574 = vlaneseq
    %v575 = vshrl.u32 %v574, 7
    %v576 = vsub.s32 0, %v575
    %v577 = vrot.slane %v555, %v576
    %v578 = vadd.f32 %v573, %v577
    %v579 = vld [vmem:[#allocation5 + $0x190] sm:$0xff]
    %v580 = vld [vmem:[#allocation5 + $0x198] sm:$0xff]
    %v581 = vld [vmem:[#allocation5 + $0x1a0] sm:$0xff]
    %v582 = vld [vmem:[#allocation5 + $0x1a8] sm:$0xff]
    %v583 = vld [vmem:[#allocation5 + $0x1b0] sm:$0xff]
    %v584 = vld [vmem:[#allocation5 + $0x1b8] sm:$0xff]
    %v585 = vld [vmem:[#allocation5 + $0x1c0] sm:$0xff]
    %v586 = vld [vmem:[#allocation5 + $0x1c8] sm:$0xff]
    %v587 = vld [vmem:[#allocation5 + $0x1d0] sm:$0xff]
    %v588 = vld [vmem:[#allocation5 + $0x1d8] sm:$0xff]
    %v589 = vld [vmem:[#allocation5 + $0x1e0] sm:$0xff]
    %v590 = vld [vmem:[#allocation5 + $0x1e8] sm:$0xff]
    %v591 = vld [vmem:[#allocation5 + $0x1f0] sm:$0xff]
    %v592 = vld [vmem:[#allocation5 + $0x1f8] sm:$0xff]
    %v593 = vld [vmem:[#allocation5 + $0x200] sm:$0xff]
    %v594 = vld [vmem:[#allocation5 + $0x208] sm:$0xff]
    %v595 = vld [vmem:[#allocation7 + $0xb] sm:$0x1]
    %v596 = vlaneseq
    %v597 = vshrl.u32 %v596, 7
    %v598 = vsub.s32 0, %v597
    %v599 = vrot.slane %v595, %v598
    %600 = vmatprep.subr.mxu0 0.0
    %601 = vmatpush1.msra.mxu0 %v579
    %602 = vmatprep.subr.mxu0 0.0
    %603 = vmatpush1.msra.mxu0 %v580
    %604 = vmatprep.subr.mxu0 0.0
    %605 = vmatpush1.msra.mxu0 %v581
    %606 = vmatprep.subr.mxu0 0.0
    %607 = vmatpush1.msra.mxu0 %v582
    %608 = vmatprep.subr.mxu0 0.0
    %609 = vmatpush1.msra.mxu0 %v583
    %610 = vmatprep.subr.mxu0 0.0
    %611 = vmatpush1.msra.mxu0 %v584
    %612 = vmatprep.subr.mxu0 0.0
    %613 = vmatpush1.msra.mxu0 %v585
    %614 = vmatprep.subr.mxu0 0.0
    %615 = vmatpush1.msra.mxu0 %v586
    %616 = vmatprep.subr.mxu0 0.0
    %617 = vmatpush1.msra.mxu0 %v587
    %618 = vmatprep.subr.mxu0 0.0
    %619 = vmatpush1.msra.mxu0 %v588
    %620 = vmatprep.subr.mxu0 0.0
    %621 = vmatpush1.msra.mxu0 %v589
    %622 = vmatprep.subr.mxu0 0.0
    %623 = vmatpush1.msra.mxu0 %v590
    %624 = vmatprep.subr.mxu0 0.0
    %625 = vmatpush1.msra.mxu0 %v591
    %626 = vmatprep.subr.mxu0 0.0
    %627 = vmatpush1.msra.mxu0 %v592
    %628 = vmatprep.subr.mxu0 0.0
    %629 = vmatpush1.msra.mxu0 %v593
    %630 = vmatprep.subr.mxu0 0.0
    %631 = vmatpush1.msra.mxu0 %v594
    %632 = vmatprep.subr.mxu0 0.0
    %633 = vmatpush1.msra.mxu0 0.0
    %634 = vmatprep.subr.mxu0 0.0
    %635 = vmatpush1.msra.mxu0 0.0
    %636 = vmatprep.subr.mxu0 0.0
    %637 = vmatpush1.msra.mxu0 0.0
    %638 = vmatprep.subr.mxu0 0.0
    %639 = vmatpush1.msra.mxu0 0.0
    %640 = vmatprep.subr.mxu0 0.0
    %641 = vmatpush1.msra.mxu0 0.0
    %642 = vmatprep.subr.mxu0 0.0
    %643 = vmatpush1.msra.mxu0 0.0
    %644 = vmatprep.subr.mxu0 0.0
    %645 = vmatpush1.msra.mxu0 0.0
    %646 = vmatprep.subr.mxu0 0.0
    %647 = vmatpush1.msra.mxu0 0.0
    %648 = vmatprep.subr.mxu0 0.0
    %649 = vmatpush1.msra.mxu0 0.0
    %650 = vmatprep.subr.mxu0 0.0
    %651 = vmatpush1.msra.mxu0 0.0
    %652 = vmatprep.subr.mxu0 0.0
    %653 = vmatpush1.msra.mxu0 0.0
    %654 = vmatprep.subr.mxu0 0.0
    %655 = vmatpush1.msra.mxu0 0.0
    %656 = vmatprep.subr.mxu0 0.0
    %657 = vmatpush1.msra.mxu0 0.0
    %658 = vmatprep.subr.mxu0 0.0
    %659 = vmatpush1.msra.mxu0 0.0
    %660 = vmatprep.subr.mxu0 0.0
    %661 = vmatpush1.msra.mxu0 0.0
    %662 = vmatprep.subr.mxu0 0.0
    %663 = vmatpush1.msra.mxu0 0.0
    %664 = vmatprep.mubr.f32.mxu0 0.0
    %665 = vmatmul.mubr.f32.gmra.mrb[0].mxu0 %v578
    %v666 = vpop.f32.mrb[0].mxu0
    %v667 = vadd.f32 %v599, %v666
    %v668 = vpop.f32.mrb[0].mxu0
    %669 = vdwg.mxu0
    %v670 = vmax.f32 %v667, 0.0
    %v671 = vld [vmem:[#allocation5 + $0x290] sm:$0xff]
    %v672 = vld [vmem:[#allocation5 + $0x298] sm:$0xff]
    %v673 = vld [vmem:[#allocation5 + $0x2a0] sm:$0xff]
    %v674 = vld [vmem:[#allocation5 + $0x2a8] sm:$0xff]
    %v675 = vld [vmem:[#allocation5 + $0x2b0] sm:$0xff]
    %v676 = vld [vmem:[#allocation5 + $0x2b8] sm:$0xff]
    %v677 = vld [vmem:[#allocation5 + $0x2c0] sm:$0xff]
    %v678 = vld [vmem:[#allocation5 + $0x2c8] sm:$0xff]
    %v679 = vld [vmem:[#allocation5 + $0x2d0] sm:$0xff]
    %v680 = vld [vmem:[#allocation5 + $0x2d8] sm:$0xff]
    %v681 = vld [vmem:[#allocation5 + $0x2e0] sm:$0xff]
    %v682 = vld [vmem:[#allocation5 + $0x2e8] sm:$0xff]
    %v683 = vld [vmem:[#allocation5 + $0x2f0] sm:$0xff]
    %v684 = vld [vmem:[#allocation5 + $0x2f8] sm:$0xff]
    %v685 = vld [vmem:[#allocation5 + $0x300] sm:$0xff]
    %v686 = vld [vmem:[#allocation5 + $0x308] sm:$0xff]
    %v687 = vld [vmem:[#allocation7 + $0xc] sm:$0x1]
    %v688 = vlaneseq
    %v689 = vshrl.u32 %v688, 7
    %v690 = vsub.s32 0, %v689
    %v691 = vrot.slane %v687, %v690
    %692 = vmatprep.subr.mxu0 0.0
    %693 = vmatpush1.msra.mxu0 %v671
    %694 = vmatprep.subr.mxu0 0.0
    %695 = vmatpush1.msra.mxu0 %v672
    %696 = vmatprep.subr.mxu0 0.0
    %697 = vmatpush1.msra.mxu0 %v673
    %698 = vmatprep.subr.mxu0 0.0
    %699 = vmatpush1.msra.mxu0 %v674
    %700 = vmatprep.subr.mxu0 0.0
    %701 = vmatpush1.msra.mxu0 %v675
    %702 = vmatprep.subr.mxu0 0.0
    %703 = vmatpush1.msra.mxu0 %v676
    %704 = vmatprep.subr.mxu0 0.0
    %705 = vmatpush1.msra.mxu0 %v677
    %706 = vmatprep.subr.mxu0 0.0
    %707 = vmatpush1.msra.mxu0 %v678
    %708 = vmatprep.subr.mxu0 0.0
    %709 = vmatpush1.msra.mxu0 %v679
    %710 = vmatprep.subr.mxu0 0.0
    %711 = vmatpush1.msra.mxu0 %v680
    %712 = vmatprep.subr.mxu0 0.0
    %713 = vmatpush1.msra.mxu0 %v681
    %714 = vmatprep.subr.mxu0 0.0
    %715 = vmatpush1.msra.mxu0 %v682
    %716 = vmatprep.subr.mxu0 0.0
    %717 = vmatpush1.msra.mxu0 %v683
    %718 = vmatprep.subr.mxu0 0.0
    %719 = vmatpush1.msra.mxu0 %v684
    %720 = vmatprep.subr.mxu0 0.0
    %721 = vmatpush1.msra.mxu0 %v685
    %722 = vmatprep.subr.mxu0 0.0
    %723 = vmatpush1.msra.mxu0 %v686
    %724 = vmatprep.subr.mxu0 0.0
    %725 = vmatpush1.msra.mxu0 0.0
    %726 = vmatprep.subr.mxu0 0.0
    %727 = vmatpush1.msra.mxu0 0.0
    %728 = vmatprep.subr.mxu0 0.0
    %729 = vmatpush1.msra.mxu0 0.0
    %730 = vmatprep.subr.mxu0 0.0
    %731 = vmatpush1.msra.mxu0 0.0
    %732 = vmatprep.subr.mxu0 0.0
    %733 = vmatpush1.msra.mxu0 0.0
    %734 = vmatprep.subr.mxu0 0.0
    %735 = vmatpush1.msra.mxu0 0.0
    %736 = vmatprep.subr.mxu0 0.0
    %737 = vmatpush1.msra.mxu0 0.0
    %738 = vmatprep.subr.mxu0 0.0
    %739 = vmatpush1.msra.mxu0 0.0
    %740 = vmatprep.subr.mxu0 0.0
    %741 = vmatpush1.msra.mxu0 0.0
    %742 = vmatprep.subr.mxu0 0.0
    %743 = vmatpush1.msra.mxu0 0.0
    %744 = vmatprep.subr.mxu0 0.0
    %745 = vmatpush1.msra.mxu0 0.0
    %746 = vmatprep.subr.mxu0 0.0
    %747 = vmatpush1.msra.mxu0 0.0
    %748 = vmatprep.subr.mxu0 0.0
    %749 = vmatpush1.msra.mxu0 0.0
    %750 = vmatprep.subr.mxu0 0.0
    %751 = vmatpush1.msra.mxu0 0.0
    %752 = vmatprep.subr.mxu0 0.0
    %753 = vmatpush1.msra.mxu0 0.0
    %754 = vmatprep.subr.mxu0 0.0
    %755 = vmatpush1.msra.mxu0 0.0
    %756 = vmatprep.mubr.f32.mxu0 0.0
    %757 = vmatmul.mubr.f32.gmra.mrb[0].mxu0 %v670
    %v758 = vpop.f32.mrb[0].mxu0
    %v759 = vadd.f32 %v691, %v758
    %v760 = vpop.f32.mrb[0].mxu0
    %761 = vdwg.mxu0
    %v762 = vadd.f32 %v578, %v759
    %v763 = vld [vmem:[#allocation7 + $0xd] sm:$0x1]
    %v764 = vld [vmem:[#allocation7 + $0xe] sm:$0x1]
    %765 = vadd.xlane.f32.xlu0 %v762
    %v766 = vpop.xlane.xlu0 %765
    %v767 = vmul.f32 %v766, 0.03125
    %v768 = vmul.f32 %v762, %v762
    %769 = vadd.xlane.f32.xlu0 %v768
    %v770 = vpop.xlane.xlu0 %769
    %v771 = vmul.f32 %v770, 0.03125
    %v772 = vmul.f32 %v767, %v767
    %v773 = vsub.f32 %v771, %v772
    %v774 = vsub.f32 %v762, %v767
    %v775 = vadd.f32 %v773, 1e-05
    %v776 = vrsqrt.pop %v775
    %v777 = vmul.f32 %v774, %v776
    %v778 = vlaneseq
    %v779 = vshrl.u32 %v778, 7
    %v780 = vsub.s32 0, %v779
    %v781 = vrot.slane %v763, %v780
    %v782 = vmul.f32 %v777, %v781
    %v783 = vlaneseq
    %v784 = vshrl.u32 %v783, 7
    %v785 = vsub.s32 0, %v784
    %v786 = vrot.slane %v764, %v785
    %v787 = vadd.f32 %v782, %v786
    %v788 = vld [vmem:[#allocation5 + $0x310] sm:$0xff]
    %v789 = vld [vmem:[#allocation5 + $0x318] sm:$0xff]
    %v790 = vld [vmem:[#allocation5 + $0x320] sm:$0xff]
    %v791 = vld [vmem:[#allocation5 + $0x328] sm:$0xff]
    %v792 = vld [vmem:[#allocation5 + $0x330] sm:$0xff]
    %v793 = vld [vmem:[#allocation5 + $0x338] sm:$0xff]
    %v794 = vld [vmem:[#allocation5 + $0x340] sm:$0xff]
    %v795 = vld [vmem:[#allocation5 + $0x348] sm:$0xff]
    %v796 = vld [vmem:[#allocation5 + $0x350] sm:$0xff]
    %v797 = vld [vmem:[#allocation5 + $0x358] sm:$0xff]
    %v798 = vld [vmem:[#allocation5 + $0x360] sm:$0xff]
    %v799 = vld [vmem:[#allocation5 + $0x368] sm:$0xff]
    %v800 = vld [vmem:[#allocation5 + $0x370] sm:$0xff]
    %v801 = vld [vmem:[#allocation5 + $0x378] sm:$0xff]
    %v802 = vld [vmem:[#allocation5 + $0x380] sm:$0xff]
    %v803 = vld [vmem:[#allocation5 + $0x388] sm:$0xff]
    %v804 = vld [vmem:[#allocation7 + $0xf] sm:$0x1]
    %v805 = vlaneseq
    %v806 = vshrl.u32 %v805, 7
    %v807 = vsub.s32 0, %v806
    %v808 = vrot.slane %v804, %v807
    %809 = vmatprep.subr.mxu0 0.0
    %810 = vmatpush1.msra.mxu0 %v788
    %811 = vmatprep.subr.mxu0 0.0
    %812 = vmatpush1.msra.mxu0 %v789
    %813 = vmatprep.subr.mxu0 0.0
    %814 = vmatpush1.msra.mxu0 %v790
    %815 = vmatprep.subr.mxu0 0.0
    %816 = vmatpush1.msra.mxu0 %v791
    %817 = vmatprep.subr.mxu0 0.0
    %818 = vmatpush1.msra.mxu0 %v792
    %819 = vmatprep.subr.mxu0 0.0
    %820 = vmatpush1.msra.mxu0 %v793
    %821 = vmatprep.subr.mxu0 0.0
    %822 = vmatpush1.msra.mxu0 %v794
    %823 = vmatprep.subr.mxu0 0.0
    %824 = vmatpush1.msra.mxu0 %v795
    %825 = vmatprep.subr.mxu0 0.0
    %826 = vmatpush1.msra.mxu0 %v796
    %827 = vmatprep.subr.mxu0 0.0
    %828 = vmatpush1.msra.mxu0 %v797
    %829 = vmatprep.subr.mxu0 0.0
    %830 = vmatpush1.msra.mxu0 %v798
    %831 = vmatprep.subr.mxu0 0.0
    %832 = vmatpush1.msra.mxu0 %v799
    %833 = vmatprep.subr.mxu0 0.0
    %834 = vmatpush1.msra.mxu0 %v800
    %835 = vmatprep.subr.mxu0 0.0
    %836 = vmatpush1.msra.mxu0 %v801
    %837 = vmatprep.subr.mxu0 0.0
    %838 = vmatpush1.msra.mxu0 %v802
    %839 = vmatprep.subr.mxu0 0.0
    %840 = vmatpush1.msra.mxu0 %v803
    %841 = vmatprep.subr.mxu0 0.0
    %842 = vmatpush1.msra.mxu0 0.0
    %843 = vmatprep.subr.mxu0 0.0
    %844 = vmatpush1.msra.mxu0 0.0
    %845 = vmatprep.subr.mxu0 0.0
    %846 = vmatpush1.msra.mxu0 0.0
    %847 = vmatprep.subr.mxu0 0.0
    %848 = vmatpush1.msra.mxu0 0.0
    %849 = vmatprep.subr.mxu0 0.0
    %850 = vmatpush1.msra.mxu0 0.0
    %851 = vmatprep.subr.mxu0 0.0
    %852 = vmatpush1.msra.mxu0 0.0
    %853 = vmatprep.subr.mxu0 0.0
    %854 = vmatpush1.msra.mxu0 0.0
    %855 = vmatprep.subr.mxu0 0.0
    %856 = vmatpush1.msra.mxu0 0.0
    %857 = vmatprep.subr.mxu0 0.0
    %858 = vmatpush1.msra.mxu0 0.0
    %859 = vmatprep.subr.mxu0 0.0
    %860 = vmatpush1.msra.mxu0 0.0
    %861 = vmatprep.subr.mxu0 0.0
    %862 = vmatpush1.msra.mxu0 0.0
    %863 = vmatprep.subr.mxu0 0.0
    %864 = vmatpush1.msra.mxu0 0.0
    %865 = vmatprep.subr.mxu0 0.0
    %866 = vmatpush1.msra.mxu0 0.0
    %867 = vmatprep.subr.mxu0 0.0
    %868 = vmatpush1.msra.mxu0 0.0
    %869 = vmatprep.subr.mxu0 0.0
    %870 = vmatpush1.msra.mxu0 0.0
    %871 = vmatprep.subr.mxu0 0.0
    %872 = vmatpush1.msra.mxu0 0.0
    %873 = vmatprep.mubr.f32.mxu0 0.0
    %874 = vmatmul.mubr.f32.gmra.mrb[0].mxu0 %v787
    %v875 = vpop.f32.mrb[0].mxu0
    %v876 = vadd.f32 %v808, %v875
    %v877 = vpop.f32.mrb[0].mxu0
    %878 = vdwg.mxu0
    %879 = vst [vmem:[#allocation8] sm:$0xff] %v876
    // Predicated region
    $region26: #{tpu_custom_call.1} parent=1 // pred_check
      _
    $region27: #{tpu_custom_call.1} parent=1 // pred_check_branch
      %881 = sbr.rel (0) target = $region29
    $region28: #{tpu_custom_call.1} parent=1 // pred_region
      %s883 = ssub.s32 128, 128
      %884 = vsyncadd [#allocation4], %s883
      %s886 = sshll.u32 [#allocation8], 4
      %s887 = int_to_ptr.vmem [resolvable:$true] %s886
      %889 = dma.vmem_to_hbm [thread:$0]  %s887, 128, %s3, [#allocation4]
    $region29: #{tpu_custom_call.1} parent=1 // pred_fallthru
      _
    // Predicated region
    $region30: #{tpu_custom_call.1} parent=1 // pred_check
      _
    $region31: #{tpu_custom_call.1} parent=1 // pred_check_branch
      %891 = sbr.rel (0) target = $region33
    $region32: #{tpu_custom_call.1} parent=1 // pred_region
      %892 = dma.done [#allocation4], 128
    $region33: #{tpu_custom_call.1} parent=1 // pred_fallthru
      _
    %893 = vsyncpa [#allocation3], 1
    %894 = vsyncpa [#allocation6], 1
    %895 = vsyncpa [#allocation4], 1

</llo_original>
